<compile_context>
chip_gen: v7x
topology: tpu7x:2x2x1
jax: 0.10.0
libtpu: 0.0.40
codegen_flags: <defaults>
</compile_context>

<pallas_src>
import functools

import jax
import jax.numpy as jnp
from jax import lax
from jax.experimental import pallas as pl
from jax.experimental.pallas import tpu as pltpu

CS = 16                      # channel scale divisor (synthetic small shapes)
def c(n):                    # scaled channel count
    return max(n // CS, 1)

# Raised above the 16 MiB (v5e) / 32 MiB (v6e,v7x) scoped defaults; still below
# v7x's 64 MiB physical VMEM.  At real widths re-derive tile sizes against
# roughly 2*(tm*tk + tk*tn + tm*tn)*2B <= ~24 MiB (v7x) / ~48 MiB (v6e).
VMEM_LIMIT = 64 * 1024 * 1024


# ----------------------------------------------------------------------------
# helpers
# ----------------------------------------------------------------------------
def _round_up(a, b):
    return ((a + b - 1) // b) * b


def _divisor_tile(n, cap):
    """Largest divisor of n that is <= cap (>=1)."""
    cap = max(1, min(n, cap))
    for t in range(cap, 0, -1):
        if n % t == 0:
            return t
    return 1


def _pick_m(M):
    """(tm, Mp): row tile and zero-padded row count (no whole-array fallback)."""
    if M <= 1024:
        Mp = _round_up(M, 8)
        return Mp, Mp
    # tm=512 keeps (tm,K)+(tm,N) tiles inside v5e's 16 MiB scoped default at
    # real widths; v6e/v7x could use 1024 with vmem_limit_bytes raised further.
    return 512, _round_up(M, 512)


def _pick_k(K):
    """(tk, Kp): K tile and zero-padded contraction length."""
    if K <= 1024:
        return K, K
    return 512, _round_up(K, 512)


def _probe_buffered1():
    """Detect pl.Buffered(1) support (single pipeline buffer for grid-constant
    blocks).  Falls back to default double buffering if unsupported."""
    if not hasattr(pl, "Buffered"):
        return False
    try:
        def _k(x_ref, o_ref):
            o_ref[...] = x_ref[...]
        x = jnp.zeros((8, 128), jnp.float32)
        y = pl.pallas_call(
            _k,
            out_shape=jax.ShapeDtypeStruct((8, 128), jnp.float32),
            grid=(1,),
            in_specs=[pl.BlockSpec((8, 128), lambda i: (0, 0),
                                   pipeline_mode=pl.Buffered(1))],
            out_specs=pl.BlockSpec((8, 128), lambda i: (0, 0)),
        )(x)
        jax.block_until_ready(y)
        return True
    except Exception:
        return False


_BUFFERED1 = _probe_buffered1()


def _spec1(block_shape, index_map):
    """BlockSpec with a single pipeline buffer for (near-)constant-index blocks:
    halves their VMEM footprint (most valuable on v7x's 64 MiB)."""
    if _BUFFERED1:
        return pl.BlockSpec(block_shape, index_map, pipeline_mode=pl.Buffered(1))
    return pl.BlockSpec(block_shape, index_map)


# ----------------------------------------------------------------------------
# Fused K-tiled matmul + affine(BN) [+ residual add] [+ ReLU] [+ L2-normalize]
# ----------------------------------------------------------------------------
def _mm_kernel(*refs, relu, l2norm, use_scale, has_residual):
    i = 0
    x_ref = refs[i]; i += 1
    w_ref = refs[i]; i += 1
    s_ref = None
    if use_scale:
        s_ref = refs[i]; i += 1
    b_ref = refs[i]; i += 1
    r_ref = None
    if has_residual:
        r_ref = refs[i]; i += 1
    o_ref = refs[i]; i += 1
    acc_ref = refs[i]

    k = pl.program_id(1)

    @pl.when(k == 0)
    def _init():
        acc_ref[...] = jnp.zeros_like(acc_ref)

    acc_ref[...] += jnp.dot(x_ref[...], w_ref[...],
                            preferred_element_type=jnp.float32)

    @pl.when(k == pl.num_programs(1) - 1)
    def _finalize():
        acc = acc_ref[...]
        if use_scale:
            acc = acc * s_ref[...]
        acc = acc + b_ref[...]
        if has_residual:
            acc = acc + r_ref[...].astype(jnp.float32)
        if relu:
            acc = jnp.maximum(acc, 0.0)
        if l2norm:
            nrm = jnp.sqrt(jnp.sum(acc * acc, axis=-1, keepdims=True))
            acc = acc / jnp.maximum(nrm, 1e-12)      # F.normalize(p=2, eps=1e-12)
        o_ref[...] = acc.astype(o_ref.dtype)


def matmul_affine(x, w, scale, shift, relu=False, l2norm=False,
                  residual=None, out_dtype=jnp.bfloat16):
    """o = relu?( x@w [*scale] + shift [+ residual] ) [row-L2-normalized]."""
    M, K = x.shape
    K2, N = w.shape
    assert K == K2
    tm, Mp = _pick_m(M)
    tk, Kp = _pick_k(K)

    x = x.astype(jnp.bfloat16)
    w = w.astype(jnp.bfloat16)
    if Mp != M:
        x = jnp.pad(x, ((0, Mp - M), (0, 0)))
    if Kp != K:
        x = jnp.pad(x, ((0, 0), (0, Kp - K)))
        w = jnp.pad(w, ((0, Kp - K), (0, 0)))
    r = None
    if residual is not None:
        r = residual.astype(jnp.bfloat16)
        if Mp != M:
            r = jnp.pad(r, ((0, Mp - M), (0, 0)))

    k_tiles = Kp // tk
    # weight index is constant over the grid when there is a single K tile.
    w_spec = (_spec1((tk, N), lambda i, k: (k, 0)) if k_tiles == 1
              else pl.BlockSpec((tk, N), lambda i, k: (k, 0)))
    in_specs = [pl.BlockSpec((tm, tk), lambda i, k: (i, k)), w_spec]
    args = [x, w]
    if scale is not None:
        in_specs.append(_spec1((1, N), lambda i, k: (0, 0)))
        args.append(scale)
    in_specs.append(_spec1((1, N), lambda i, k: (0, 0)))
    args.append(shift)
    if r is not None:
        in_specs.append(pl.BlockSpec((tm, N), lambda i, k: (i, 0)))
        args.append(r)

    out = pl.pallas_call(
        functools.partial(_mm_kernel, relu=relu, l2norm=l2norm,
                          use_scale=scale is not None,
                          has_residual=r is not None),
        out_shape=jax.ShapeDtypeStruct((Mp, N), out_dtype),
        grid_spec=pltpu.PrefetchScalarGridSpec(
            num_scalar_prefetch=0,
            grid=(Mp // tm, k_tiles),
            in_specs=in_specs,
            out_specs=pl.BlockSpec((tm, N), lambda i, k: (i, 0)),
            scratch_shapes=[pltpu.VMEM((tm, N), jnp.float32)],
        ),
        compiler_params=pltpu.CompilerParams(
            dimension_semantics=("parallel", "arbitrary"),
            vmem_limit_bytes=VMEM_LIMIT),
    )(*args)
    return out[:M] if Mp != M else out


# ----------------------------------------------------------------------------
# Fused in-kernel 3x3 conv (stride 1, pad 1) + folded BN (+ReLU)
#   - Wp padded to a multiple of 8 -> sublane-aligned tap slices
#   - garbage columns stripped in VMEM, clean (B,H,W,Cout) stored
# ----------------------------------------------------------------------------
def _conv3x3_kernel(x_ref, w_ref, s_ref, b_ref, o_ref, *, Wp, W, Rt, relu):
    t = pl.program_id(1)
    T = Rt * Wp                     # accumulator rows (flat, incl. garbage cols)
    base = t * T                    # multiple of 8 (Wp and Rt*Wp are)
    acc = None
    for ky in range(3):
        row = pl.multiple_of(base + ky * Wp, 8)
        for kx in range(3):
            xs = x_ref[0, pl.ds(row + kx, T), :]
            d = jnp.dot(xs, w_ref[ky * 3 + kx],
                        preferred_element_type=jnp.float32)
            acc = d if acc is None else acc + d
    acc = acc * s_ref[...] + b_ref[...]
    if relu:
        acc = jnp.maximum(acc, 0.0)
    # strip the (Wp - W) garbage columns per image row inside VMEM
    acc = acc.reshape(Rt, Wp, -1)[:, :W, :]
    o_ref[0] = acc.astype(o_ref.dtype)


def conv3x3_fused(x, w9, scale, shift, relu=False):
    """3x3 conv, stride 1, pad 1.  x:(B,H,W,Cin), w9:(9,Cin,Cout) bf16."""
    B, H, W, Cin = x.shape
    Cout = w9.shape[-1]
    Hp = H + 2
    Wp = _round_up(W + 2, 8)                  # sublane-aligned padded row width
    Lin = _round_up(Hp * Wp + 2, 8)           # max tap end = Hp*Wp + 2 (slack re-derived)

    xp = jnp.pad(x.astype(jnp.bfloat16),
                 ((0, 0), (1, 1), (1, Wp - W - 1), (0, 0)))
    xf = xp.reshape(B, Hp * Wp, Cin)
    xf = jnp.pad(xf, ((0, 0), (0, Lin - Hp * Wp), (0, 0)))

    Rt = _divisor_tile(H, max(1, 1024 // Wp))  # image rows per grid step
    grid = (B, H // Rt)

    # TODO(synk): at real resolutions switch the image block to an H-tile with a
    # 2-row halo instead of a single-buffered resident image, and fatten the
    # per-ky dots to K=3*Cin for v6e's 256-deep MXU.
    return pl.pallas_call(
        functools.partial(_conv3x3_kernel, Wp=Wp, W=W, Rt=Rt, relu=relu),
        out_shape=jax.ShapeDtypeStruct((B, H, W, Cout), jnp.bfloat16),
        grid_spec=pltpu.PrefetchScalarGridSpec(
            num_scalar_prefetch=0,
            grid=grid,
            in_specs=[
                _spec1((1, Lin, Cin), lambda b, t: (b, 0, 0)),       # image (1 buffer)
                _spec1((9, Cin, Cout), lambda b, t: (0, 0, 0)),      # weights
                _spec1((1, Cout), lambda b, t: (0, 0)),              # BN scale
                _spec1((1, Cout), lambda b, t: (0, 0)),              # BN shift
            ],
            out_specs=pl.BlockSpec((1, Rt, W, Cout), lambda b, t: (b, t, 0, 0)),
        ),
        compiler_params=pltpu.CompilerParams(
            dimension_semantics=("parallel", "parallel"),
            vmem_limit_bytes=VMEM_LIMIT),
    )(xf, w9, scale, shift)


def conv3x3_im2col(x, w9, scale, shift, relu, stride):
    """Strided 3x3 conv (encoder stand-in only) via im2col + fused matmul.
    TODO(synk): replace with a strided fused kernel (space-to-depth) so the 9x
    patch tensor never hits HBM — matters most on v5e."""
    B, H, W, C = x.shape
    Ho, Wo = H // stride, W // stride
    xp = jnp.pad(x.astype(jnp.bfloat16), ((0, 0), (1, 1), (1, 1), (0, 0)))
    cols = [xp[:, dy:dy + stride * (Ho - 1) + 1:stride,
                  dx:dx + stride * (Wo - 1) + 1:stride, :]
            for dy in range(3) for dx in range(3)]
    patches = jnp.stack(cols, axis=3).reshape(B * Ho * Wo, 9 * C)
    w = w9.reshape(9 * C, -1)
    y = matmul_affine(patches, w, scale, shift, relu=relu)
    return y.reshape(B, Ho, Wo, -1)


def conv3x3(x, w9, scale, shift, relu=False, stride=1):
    if stride == 1:
        return conv3x3_fused(x, w9, scale, shift, relu=relu)
    return conv3x3_im2col(x, w9, scale, shift, relu, stride)


def conv1x1(x, w, scale, shift, relu=False, l2norm=False, residual=None,
            out_dtype=jnp.bfloat16):
    B, H, W, C = x.shape
    r = residual.reshape(B * H * W, -1) if residual is not None else None
    y = matmul_affine(x.reshape(B * H * W, C), w, scale, shift, relu=relu,
                      l2norm=l2norm, residual=r, out_dtype=out_dtype)
    return y.reshape(B, H, W, -1)


# ----------------------------------------------------------------------------
# ConvTranspose2d(k=2, s=2): interleave folded into the out BlockSpec.
#   output logical shape (B, H, 2, W, 2*Cout) reshapes FOR FREE (row-major) to
#   (B, 2H, 2W, Cout) — no XLA 6-D transpose / HBM round trip.
# ----------------------------------------------------------------------------
def _deconv_kernel(x_ref, w_ref, b_ref, o_ref):
    rt, w_, cin = x_ref.shape[1], x_ref.shape[2], x_ref.shape[3]
    c2 = w_ref.shape[-1]
    x = x_ref[0].reshape(rt * w_, cin)
    y = jnp.dot(x, w_ref[0], preferred_element_type=jnp.float32) + b_ref[...]
    o_ref[...] = y.reshape(1, rt, 1, w_, c2).astype(o_ref.dtype)


def conv_transpose2x2(x, w2, bias2):
    """x:(B,H,W,Cin); w2:(2, Cin, 2*Cout) with columns (dx, Cout); bias2:(1, 2*Cout)."""
    B, H, W, Cin = x.shape
    Cout2 = w2.shape[-1]
    Cout = Cout2 // 2
    x = x.astype(jnp.bfloat16)
    Rt = _divisor_tile(H, max(1, 2048 // max(W, 1)))
    grid = (B, H // Rt, 2)                          # dy innermost

    out5 = pl.pallas_call(
        _deconv_kernel,
        out_shape=jax.ShapeDtypeStruct((B, H, 2, W, Cout2), jnp.bfloat16),
        grid_spec=pltpu.PrefetchScalarGridSpec(
            num_scalar_prefetch=0,
            grid=grid,
            in_specs=[
                pl.BlockSpec((1, Rt, W, Cin), lambda b, t, dy: (b, t, 0, 0)),
                pl.BlockSpec((1, Cin, Cout2), lambda b, t, dy: (dy, 0, 0)),
                _spec1((1, Cout2), lambda b, t, dy: (0, 0)),
            ],
            out_specs=pl.BlockSpec((1, Rt, 1, W, Cout2),
                                   lambda b, t, dy: (b, t, dy, 0, 0)),
        ),
        compiler_params=pltpu.CompilerParams(
            dimension_semantics=("parallel", "parallel", "arbitrary"),
            vmem_limit_bytes=VMEM_LIMIT),
    )(x, w2, bias2)
    return out5.reshape(B, 2 * H, 2 * W, Cout)


def maxpool3x3_s2_p1(x):
    # TODO(synk): max-pool kept in plain JAX glue (tiny op in the stand-in encoder).
    return lax.reduce_window(x, jnp.array(-jnp.inf, x.dtype), lax.max,
                             window_dimensions=(1, 3, 3, 1),
                             window_strides=(1, 2, 2, 1),
                             padding=((0, 0), (1, 1), (1, 1), (0, 0)))


# ----------------------------------------------------------------------------
# Fused segmentation head: one lane-dense MXU pass per row tile.
#   logits = d_thick @ Wa(C,128) + d_thin @ Wb(C,128) + bias(1,128); sigmoid;
#   unmasked (tm,128) store.  cols 0/1 = thick/thin sigmoids; max is XLA glue.
# ----------------------------------------------------------------------------
def _seg_head_kernel(a_ref, b_ref, wa_ref, wb_ref, bias_ref, o_ref):
    la = jnp.dot(a_ref[...], wa_ref[...], preferred_element_type=jnp.float32)
    lb = jnp.dot(b_ref[...], wb_ref[...], preferred_element_type=jnp.float32)
    logits = la + lb + bias_ref[...]
    o_ref[...] = 1.0 / (1.0 + jnp.exp(-logits))


def seg_head(d_thick, d_thin, w_thick, b_thick, w_thin, b_thin):
    B, H, W, C = d_thick.shape
    M = B * H * W
    LANE = 128
    tm, Mp = _pick_m(M)

    a = d_thick.reshape(M, C).astype(jnp.bfloat16)
    b = d_thin.reshape(M, C).astype(jnp.bfloat16)
    if Mp != M:
        a = jnp.pad(a, ((0, Mp - M), (0, 0)))
        b = jnp.pad(b, ((0, Mp - M), (0, 0)))

    wa = jnp.zeros((C, LANE), jnp.float32).at[:, 0].set(
        w_thick.reshape(-1)).astype(jnp.bfloat16)
    wb = jnp.zeros((C, LANE), jnp.float32).at[:, 1].set(
        w_thin.reshape(-1)).astype(jnp.bfloat16)
    bias = (jnp.zeros((1, LANE), jnp.float32)
            .at[0, 0].set(b_thick.reshape(-1)[0])
            .at[0, 1].set(b_thin.reshape(-1)[0]))

    s = pl.pallas_call(
        _seg_head_kernel,
        out_shape=jax.ShapeDtypeStruct((Mp, LANE), jnp.float32),
        grid_spec=pltpu.PrefetchScalarGridSpec(
            num_scalar_prefetch=0,
            grid=(Mp // tm,),
            in_specs=[
                pl.BlockSpec((tm, C), lambda i: (i, 0)),
                pl.BlockSpec((tm, C), lambda i: (i, 0)),
                _spec1((C, LANE), lambda i: (0, 0)),
                _spec1((C, LANE), lambda i: (0, 0)),
                _spec1((1, LANE), lambda i: (0, 0)),
            ],
            out_specs=pl.BlockSpec((tm, LANE), lambda i: (i, 0)),
        ),
        compiler_params=pltpu.CompilerParams(
            dimension_semantics=("parallel",),
            vmem_limit_bytes=VMEM_LIMIT),
    )(a, b, wa, wb, bias)

    s = s[:M]
    sa = s[:, 0].reshape(B, H, W, 1)
    sb = s[:, 1].reshape(B, H, W, 1)
    return sa, sb, jnp.maximum(sa, sb)


# ----------------------------------------------------------------------------
# Standalone L2-normalize (only used for the memory-queue buffers at init)
# ----------------------------------------------------------------------------
def _l2norm_kernel(x_ref, o_ref):
    x = x_ref[...]
    nrm = jnp.sqrt(jnp.sum(x * x, axis=-1, keepdims=True))
    o_ref[...] = x / jnp.maximum(nrm, 1e-12)


def l2_normalize(x):
    M, C = x.shape
    return pl.pallas_call(
        _l2norm_kernel,
        out_shape=jax.ShapeDtypeStruct((M, C), jnp.float32),
        grid_spec=pltpu.PrefetchScalarGridSpec(
            num_scalar_prefetch=0,
            grid=(1,),
            in_specs=[pl.BlockSpec((M, C), lambda i: (0, 0))],
            out_specs=pl.BlockSpec((M, C), lambda i: (0, 0)),
        ),
    )(x)


# ----------------------------------------------------------------------------
# Deterministic parameter initialization
# ----------------------------------------------------------------------------
class Init:
    def __init__(self, seed=0):
        self.key = jax.random.PRNGKey(seed)

    def _k(self):
        self.key, sub = jax.random.split(self.key)
        return sub

    def dense(self, fan_in, fan_out):
        std = (2.0 / fan_in) ** 0.5
        return std * jax.random.normal(self._k(), (fan_in, fan_out), jnp.float32)

    def bn(self, ch):
        # folded inference-mode BatchNorm: y = x * scale + shift
        scale = 1.0 + 0.1 * jax.random.normal(self._k(), (1, ch), jnp.float32)
        shift = 0.1 * jax.random.normal(self._k(), (1, ch), jnp.float32)
        return scale, shift

    def bias(self, ch):
        return 0.1 * jax.random.normal(self._k(), (1, ch), jnp.float32)

    def randn(self, shape):
        return jax.random.normal(self._k(), shape, jnp.float32)


def conv3x3_w(ini, cin, cout):
    return ini.dense(9 * cin, cout).reshape(9, cin, cout).astype(jnp.bfloat16)


def init_up_conv(ini, cin, cout):
    w = ini.dense(cin, 4 * cout).reshape(cin, 2, 2, cout)          # (cin,dy,dx,co)
    w = jnp.transpose(w, (1, 0, 2, 3)).reshape(2, cin, 2 * cout)    # (dy,cin,dx*co)
    return dict(w=w.astype(jnp.bfloat16), b2=jnp.tile(ini.bias(cout), (1, 2)))


def init_res_conv_block(ini, cin, cout):
    return dict(
        conv1=dict(w=conv3x3_w(ini, cin, cout), bn=ini.bn(cout)),
        # TODO(synk): SplAtConv2d(radix=2, groups=2) from resnest is not provided;
        # stand-in = plain 3x3 conv + folded BN with the same channel contract.
        splat=dict(w=conv3x3_w(ini, cout, cout), bn=ini.bn(cout)),
        down=dict(w=ini.dense(cin, cout).astype(jnp.bfloat16), bn=ini.bn(cout)),
    )


def init_proj_head(ini, dim_in, proj_dim, in_ch):
    return dict(
        c1=dict(w=conv3x3_w(ini, in_ch, dim_in), bn=ini.bn(dim_in)),
        c2=dict(w=ini.dense(dim_in, dim_in).astype(jnp.bfloat16),
                b=ini.bias(dim_in), bn=ini.bn(dim_in)),
        c3=dict(w=ini.dense(dim_in, proj_dim).astype(jnp.bfloat16),
                b=ini.bias(proj_dim)),
    )


def init_model(seed=0):
    ini = Init(seed)
    P = {}
    # --- encoder stand-in (see TODO at top of file) ---
    P['first'] = dict(w=conv3x3_w(ini, 3, c(64)), bn=ini.bn(c(64)))
    P['enc1'] = dict(w=conv3x3_w(ini, c(64), c(256)), bn=ini.bn(c(256)))
    P['enc2'] = dict(w=conv3x3_w(ini, c(256), c(512)), bn=ini.bn(c(512)))
    P['enc3'] = dict(w=conv3x3_w(ini, c(512), c(1024)), bn=ini.bn(c(1024)))
    P['enc4'] = dict(w=conv3x3_w(ini, c(1024), c(2048)), bn=ini.bn(c(2048)))
    # --- thick decoder ---
    P['up5_thick'] = init_up_conv(ini, c(2048), c(1024))
    P['upc5_thick'] = init_res_conv_block(ini, c(2048), c(1024))
    P['up4_thick'] = init_up_conv(ini, c(1024), c(512))
    P['upc4_thick'] = init_res_conv_block(ini, c(1024), c(512))
    P['up3_thick'] = init_up_conv(ini, c(512), c(256))
    P['upc3_thick'] = init_res_conv_block(ini, c(512), c(256))
    P['up2_thick'] = init_up_conv(ini, c(256), c(64))
    P['upc2_thick'] = init_res_conv_block(ini, c(128), c(64))
    P['up1_thick'] = init_up_conv(ini, c(64), c(64))
    P['upc1_thick'] = init_res_conv_block(ini, c(64), c(32))
    P['conv1x1_thick'] = dict(w=ini.dense(c(32), 1), b=ini.bias(1))
    # --- thin decoder ---
    P['up2_thin'] = init_up_conv(ini, c(256), c(64))
    P['upc2_thin'] = init_res_conv_block(ini, c(128), c(64))
    P['up1_thin'] = init_up_conv(ini, c(64), c(64))
    P['upc1_thin'] = init_res_conv_block(ini, c(64), c(32))
    P['conv1x1_thin'] = dict(w=ini.dense(c(32), 1), b=ini.bias(1))
    # --- projection heads (convmlp) ---
    P['proj1'] = init_proj_head(ini, dim_in=c(256), proj_dim=c(256), in_ch=c(32))
    P['proj2'] = init_proj_head(ini, dim_in=c(256), proj_dim=c(256), in_ch=c(32))
    # --- registered memory buffers (randn, L2-normalized with the Pallas kernel) ---
    nc, r, ch = 2, 20, c(256)
    def queue():
        return l2_normalize(ini.randn((nc * r, ch))).reshape(nc, r, ch)
    for name in ('segment_queue_thick', 'pixel_queue_thick',
                 'segment_queue_thin', 'pixel_queue_thin'):
        P[name] = queue()
        P[name + '_ptr'] = jnp.zeros((nc,), jnp.int32)
    return P


# ----------------------------------------------------------------------------
# Module forward passes
# ----------------------------------------------------------------------------
def apply_res_conv_block(p, x):
    h = conv3x3(x, p['conv1']['w'], *p['conv1']['bn'], relu=True)
    h = conv3x3(h, p['splat']['w'], *p['splat']['bn'], relu=True)   # SplAt stand-in + ReLU
    # downsample 1x1 + BN with residual-add + ReLU fused in the epilogue
    return conv1x1(x, p['down']['w'], *p['down']['bn'], relu=True, residual=h)


def apply_up_conv(p, x):
    return conv_transpose2x2(x, p['w'], p['b2'])


def apply_proj_head(p, x):
    h = conv3x3(x, p['c1']['w'], *p['c1']['bn'], relu=False)           # conv3x3(no bias)+BN
    s2, sh2 = p['c2']['bn']
    h = conv1x1(h, p['c2']['w'], s2, s2 * p['c2']['b'] + sh2)          # conv1x1+bias folded into BN
    # conv1x1 + bias with channel L2-normalize fused in the epilogue
    return conv1x1(h, p['c3']['w'], None, p['c3']['b'],
                   l2norm=True, out_dtype=jnp.float32)


def srf_unet_forward(P, x):
    x = x.astype(jnp.bfloat16)
    # encoder (stand-in, see TODO)
    x0 = conv3x3(x, P['first']['w'], *P['first']['bn'], relu=True, stride=2)
    x1 = maxpool3x3_s2_p1(x0)
    x2 = conv3x3(x1, P['enc1']['w'], *P['enc1']['bn'], relu=True, stride=1)
    x3 = conv3x3(x2, P['enc2']['w'], *P['enc2']['bn'], relu=True, stride=2)
    x4 = conv3x3(x3, P['enc3']['w'], *P['enc3']['bn'], relu=True, stride=2)

    down_pad = (x4.shape[1] % 2 == 1)
    right_pad = (x4.shape[2] % 2 == 1)
    if down_pad:
        x4 = jnp.pad(x4, ((0, 0), (0, 1), (0, 0), (0, 0)))
    if right_pad:
        x4 = jnp.pad(x4, ((0, 0), (0, 0), (0, 1), (0, 0)))
    x5 = conv3x3(x4, P['enc4']['w'], *P['enc4']['bn'], relu=True, stride=2)

    # --- thick branch ---
    d5 = apply_up_conv(P['up5_thick'], x5)
    d5 = jnp.concatenate([x4, d5], axis=-1)
    if down_pad and not right_pad:
        d5 = d5[:, :-1, :, :]
    if right_pad and not down_pad:
        d5 = d5[:, :, :-1, :]
    if down_pad and right_pad:
        d5 = d5[:, :-1, :-1, :]
    d5 = apply_res_conv_block(P['upc5_thick'], d5)
    d4 = apply_up_conv(P['up4_thick'], d5)
    d4 = jnp.concatenate([x3, d4], axis=-1)
    d4 = apply_res_conv_block(P['upc4_thick'], d4)
    d3 = apply_up_conv(P['up3_thick'], d4)
    d3 = jnp.concatenate([x2, d3], axis=-1)
    d3 = apply_res_conv_block(P['upc3_thick'], d3)
    d2 = apply_up_conv(P['up2_thick'], d3)
    d2 = jnp.concatenate([x0, d2], axis=-1)
    d2 = apply_res_conv_block(P['upc2_thick'], d2)
    d1 = apply_up_conv(P['up1_thick'], d2)
    d1_thick1 = apply_res_conv_block(P['upc1_thick'], d1)

    # --- thin branch ---
    t2 = apply_up_conv(P['up2_thin'], x2)
    t2 = jnp.concatenate([x0, t2], axis=-1)
    t2 = apply_res_conv_block(P['upc2_thin'], t2)
    t1 = apply_up_conv(P['up1_thin'], t2)
    d1_thin1 = apply_res_conv_block(P['upc1_thin'], t1)

    # fused lane-dense 1x1 heads + sigmoid (max is trivially fused XLA glue)
    out_thick, out_thin, out = seg_head(
        d1_thick1, d1_thin1,
        P['conv1x1_thick']['w'], P['conv1x1_thick']['b'],
        P['conv1x1_thin']['w'], P['conv1x1_thin']['b'])
    return out_thick, out_thin, out, d1_thick1, d1_thin1


def srf_contrast_forward(P, x):
    out_thick, out_thin, out, d1_thick, d1_thin = srf_unet_forward(P, x)
    emb_thick = apply_proj_head(P['proj1'], d1_thick)
    emb_thin = apply_proj_head(P['proj2'], d1_thin)
    return dict(seg_thick=out_thick, embed_thick=emb_thick,
                seg_thin=out_thin, embed_thin=emb_thin, seg=out)


@jax.jit
def _forward_core(P, im_q_nchw):
    # PyTorch NCHW input -> NHWC internally; outputs converted back to NCHW.
    x = jnp.transpose(im_q_nchw, (0, 2, 3, 1))
    ret = srf_contrast_forward(P, x)
    return {k: jnp.transpose(v, (0, 3, 1, 2)) for k, v in ret.items()}


def srf_contrast_mem_forward(P, im_q_nchw, lb_q=None, with_embed=True, is_eval=False):
    ret = _forward_core(P, im_q_nchw.astype(jnp.float32))
    if is_eval or lb_q is None:
        return ret
    return dict(
        seg=ret['seg'],
        seg_thick=ret['seg_thick'], embed_thick=ret['embed_thick'],
        seg_thin=ret['seg_thin'], embed_thin=ret['embed_thin'],
        key_thick=lax.stop_gradient(ret['embed_thick']),
        lb_thick_key=lb_q[0].astype(jnp.int32),
        key_thin=lax.stop_gradient(ret['embed_thin']),
        lb_thin_key=lb_q[1].astype(jnp.int32),
    )


# ----------------------------------------------------------------------------
if __name__ == "__main__":
    key = jax.random.PRNGKey(0)
    k1, k2, k3 = jax.random.split(key, 3)
    B, H, W = 2, 64, 64
    im_q = jax.random.normal(k1, (B, 3, H, W), jnp.float32)
    lb_thick = jax.random.randint(k2, (B, H, W), 0, 2)
    lb_thin = jax.random.randint(k3, (B, H, W), 0, 2)

    params = init_model(seed=0)
    out = srf_contrast_mem_forward(params, im_q, lb_q=(lb_thick, lb_thin))
    out = jax.tree_util.tree_map(jax.block_until_ready, out)

    # light sanity checks
    assert out['seg'].shape == (B, 1, H, W)
    assert out['seg_thick'].shape == (B, 1, H, W)
    assert out['seg_thin'].shape == (B, 1, H, W)
    assert out['embed_thick'].shape == (B, c(256), H, W)
    assert out['lb_thick_key'].dtype == jnp.int32
    assert bool(jnp.all(out['seg'] >= jnp.maximum(out['seg_thick'], out['seg_thin']) - 1e-6))
    print("KERNEL_OK")
</pallas_src>

<mosaic_0001>
module attributes {stable_mosaic.version = 11 : i64} {
  func.func @_k(%arg0: i32, %arg1: memref<8x128xf32, #tpu.memory_space<vmem>>, %arg2: memref<8x128xf32, #tpu.memory_space<vmem>>) attributes {dimension_semantics = [#tpu.dimension_semantics<arbitrary>], iteration_bounds = array<i64: 1>, scalar_prefetch = 0 : i64, scratch_operands = 0 : i64, tpu.core_type = #tpu.core_type<tc>, window_params = [{pipeline_mode = #tpu.pipeline_mode<synchronous>, transform_indices = @transform_0, window_bounds = array<i64: 8, 128>}, {pipeline_mode = #tpu.pipeline_mode<synchronous>, transform_indices = @transform_1, window_bounds = array<i64: 8, 128>}]} {
    %c0 = arith.constant 0 : index
    %c0_0 = arith.constant 0 : index
    %0 = vector.load %arg1[%c0, %c0_0] : memref<8x128xf32, #tpu.memory_space<vmem>>, vector<8x128xf32>
    %c0_1 = arith.constant 0 : index
    %c0_2 = arith.constant 0 : index
    %1 = vector.load %arg2[%c0_1, %c0_2] : memref<8x128xf32, #tpu.memory_space<vmem>>, vector<8x128xf32>
    tpu.vector_store %arg2[%c0_1, %c0_2], %0 {strides = array<i32>} : memref<8x128xf32, #tpu.memory_space<vmem>>, vector<8x128xf32>,
    return
  }
  func.func @transform_0(%arg0: i32) -> (i32, i32) {
    %c0_i32 = arith.constant 0 : i32
    %c0_i32_0 = arith.constant 0 : i32
    %c0_i32_1 = arith.constant 0 : i32
    return %c0_i32, %c0_i32_0 : i32, i32
  }
  func.func @transform_1(%arg0: i32) -> (i32, i32) {
    %c0_i32 = arith.constant 0 : i32
    %c0_i32_0 = arith.constant 0 : i32
    %c0_i32_1 = arith.constant 0 : i32
    return %c0_i32, %c0_i32_0 : i32, i32
  }
}

module attributes {stable_mosaic.version = 11 : i64} {
  func.func @_l2norm_kernel(%arg0: i32, %arg1: memref<40x16xf32, #tpu.memory_space<vmem>>, %arg2: memref<40x16xf32, #tpu.memory_space<vmem>>) attributes {dimension_semantics = [#tpu.dimension_semantics<arbitrary>], iteration_bounds = array<i64: 1>, scalar_prefetch = 0 : i64, scratch_operands = 0 : i64, tpu.core_type = #tpu.core_type<tc>, window_params = [{pipeline_mode = #tpu.pipeline_mode<synchronous>, transform_indices = @transform_0, window_bounds = array<i64: 40, 16>}, {pipeline_mode = #tpu.pipeline_mode<synchronous>, transform_indices = @transform_1, window_bounds = array<i64: 40, 16>}]} {
    %c0 = arith.constant 0 : index
    %c0_0 = arith.constant 0 : index
    %0 = vector.load %arg1[%c0, %c0_0] : memref<40x16xf32, #tpu.memory_space<vmem>>, vector<40x16xf32>
    %1 = arith.mulf %0, %0 : vector<40x16xf32>
    %cst = arith.constant dense<0.000000e+00> : vector<40xf32>
    %2 = vector.multi_reduction <add>, %1, %cst [1] : vector<40x16xf32> to vector<40xf32>
    %3 = vector.shape_cast %2 : vector<40xf32> to vector<40x1xf32>
    %4 = math.sqrt %3 : vector<40x1xf32>
    %cst_1 = arith.constant 9.99999996E-13 : f32
    %5 = vector.broadcast %cst_1 : f32 to vector<40x1xf32>
    %6 = arith.maximumf %4, %5 : vector<40x1xf32>
    %7 = vector.broadcast %6 : vector<40x1xf32> to vector<40x16xf32>
    %8 = arith.divf %0, %7 : vector<40x16xf32>
    %c0_2 = arith.constant 0 : index
    %c0_3 = arith.constant 0 : index
    %9 = vector.load %arg2[%c0_2, %c0_3] : memref<40x16xf32, #tpu.memory_space<vmem>>, vector<40x16xf32>
    tpu.vector_store %arg2[%c0_2, %c0_3], %8 {strides = array<i32>} : memref<40x16xf32, #tpu.memory_space<vmem>>, vector<40x16xf32>,
    return
  }
  func.func @transform_0(%arg0: i32) -> (i32, i32) {
    %c0_i32 = arith.constant 0 : i32
    %c0_i32_0 = arith.constant 0 : i32
    %c0_i32_1 = arith.constant 0 : i32
    return %c0_i32, %c0_i32_0 : i32, i32
  }
  func.func @transform_1(%arg0: i32) -> (i32, i32) {
    %c0_i32 = arith.constant 0 : i32
    %c0_i32_0 = arith.constant 0 : i32
    %c0_i32_1 = arith.constant 0 : i32
    return %c0_i32, %c0_i32_0 : i32, i32
  }
}

</mosaic_0001>

<llo_original>
// kernel: tpu_custom_call.1
$region0: #{tpu_custom_call.1}
  #allocation0 [shape = 'u32[]', space=smem, size = 0x4, offset = 0x4, fixed_abs, tag = 'smem constant byte address 0x4 - core index']
  #allocation1 [shape = 'u32[144,128]{1,0:T(1,128)}', space=vmem, size = 0x12000, scoped, tag = 'internal scratch']
  %s0 = inlined_call_operand.hbm [shape: f32[8,128], index: 0, kind: input, shape index: {}]
  %s1 = inlined_call_operand.hbm [shape: f32[8,128], index: 1, kind: output, shape index: {}]
  %s2 = sld [smem:[#allocation0]]
  $region18: #{tpu_custom_call.1} parent=0
    _
  %s4 = ssub.s32 1, %s2
  %s5 = scalar_select 0, %s4, %s2
  $region1: #{tpu_custom_call.1} parent=0
    #allocation2 [shape = 'u8[4096]{0}', space=vmem, size = 0x1000, scoped, tag = 'input window, operand 0, single buffered']
    #allocation3 [shape = 's32[1]{0}', space=sflag, size = 0x4, scoped, tag = 'scoped memory for tpu_custom_call.1']
    #allocation4 [shape = 's32[1]{0}', space=sflag, size = 0x4, scoped, tag = 'scoped memory for tpu_custom_call.1']
    #allocation5 [shape = 'u8[4096]{0}', space=vmem, size = 0x1000, scoped, tag = 'output window, operand 0, single buffered']
    %6 = vsyncpa [#allocation3], 0
    %7 = vsyncpa [#allocation4], 0
    // Predicated region
    $region2: #{tpu_custom_call.1} parent=1 // pred_check
      _
    $region3: #{tpu_custom_call.1} parent=1 // pred_check_branch
      %9 = sbr.rel (0) target = $region5
    $region4: #{tpu_custom_call.1} parent=1 // pred_region
      %s11 = ssub.s32 128, 128
      %12 = vsyncadd [#allocation3], %s11
      %s14 = sshll.u32 [#allocation2], 4
      %s15 = int_to_ptr.vmem [resolvable:$true] %s14
      %17 = dma.hbm_to_vmem [thread:$0]  %s0, 128, %s15, [#allocation3]
    $region5: #{tpu_custom_call.1} parent=1 // pred_fallthru
      _
    // Predicated region
    $region6: #{tpu_custom_call.1} parent=1 // pred_check
      _
    $region7: #{tpu_custom_call.1} parent=1 // pred_check_branch
      %19 = sbr.rel (0) target = $region9
    $region8: #{tpu_custom_call.1} parent=1 // pred_region
      %20 = dma.done [#allocation3], 128
    $region9: #{tpu_custom_call.1} parent=1 // pred_fallthru
      _
    %v21 = vld [vmem:[#allocation2] sm:$0xff]
    %22 = vst [vmem:[#allocation5] sm:$0xff] %v21
    // Predicated region
    $region10: #{tpu_custom_call.1} parent=1 // pred_check
      _
    $region11: #{tpu_custom_call.1} parent=1 // pred_check_branch
      %24 = sbr.rel (0) target = $region13
    $region12: #{tpu_custom_call.1} parent=1 // pred_region
      %s26 = ssub.s32 128, 128
      %27 = vsyncadd [#allocation4], %s26
      %s29 = sshll.u32 [#allocation5], 4
      %s30 = int_to_ptr.vmem [resolvable:$true] %s29
      %32 = dma.vmem_to_hbm [thread:$0]  %s30, 128, %s1, [#allocation4]
    $region13: #{tpu_custom_call.1} parent=1 // pred_fallthru
      _
    // Predicated region
    $region14: #{tpu_custom_call.1} parent=1 // pred_check
      _
    $region15: #{tpu_custom_call.1} parent=1 // pred_check_branch
      %34 = sbr.rel (0) target = $region17
    $region16: #{tpu_custom_call.1} parent=1 // pred_region
      %35 = dma.done [#allocation4], 128
    $region17: #{tpu_custom_call.1} parent=1 // pred_fallthru
      _
    %36 = vsyncpa [#allocation3], 1
    %37 = vsyncpa [#allocation4], 1

// kernel: tpu_custom_call.1
$region0: #{tpu_custom_call.1}
  #allocation0 [shape = 'u32[]', space=smem, size = 0x4, offset = 0x4, fixed_abs, tag = 'smem constant byte address 0x4 - core index']
  #allocation1 [shape = 'u32[144,128]{1,0:T(1,128)}', space=vmem, size = 0x12000, scoped, tag = 'internal scratch']
  %s0 = inlined_call_operand.vmem [shape: f32[40,16], index: 0, kind: input, shape index: {}]
  %s1 = inlined_call_operand.vmem [shape: f32[40,16], index: 1, kind: output, shape index: {}]
  %s2 = sld [smem:[#allocation0]]
  $region14: #{tpu_custom_call.1} parent=0
    _
  %s4 = ssub.s32 1, %s2
  %s5 = scalar_select 0, %s4, %s2
  // Predicated region
  $region2: #{tpu_custom_call.1} parent=0 // pred_check
    _
  $region3: #{tpu_custom_call.1} parent=0 // pred_check_branch
    %7 = sbr.rel (0) target = $region5
  $region4: #{tpu_custom_call.1} parent=0 // pred_region
    _
  $region5: #{tpu_custom_call.1} parent=0 // pred_fallthru
    _
  %v8 = vld [vmem:[%s0] sm:$0xff]
  %v9 = vld [vmem:[%s0 + $0x8] sm:$0xff]
  %v10 = vld [vmem:[%s0 + $0x10] sm:$0xff]
  %v11 = vld [vmem:[%s0 + $0x18] sm:$0xff]
  %v12 = vld [vmem:[%s0 + $0x20] sm:$0xff]
  %v13 = vmul.f32 %v8, %v8
  %v14 = vmul.f32 %v9, %v9
  %v15 = vmul.f32 %v10, %v10
  %v16 = vmul.f32 %v11, %v11
  %v17 = vmul.f32 %v12, %v12
  %vm18 = vcmask 130048
  %v19 = vsel %vm18, %v13, 0.0
  %20 = vadd.xlane.f32.xlu0 %v19
  %v21 = vpop.xlane.xlu0 %20
  %v22 = vsel %vm18, %v14, 0.0
  %23 = vadd.xlane.f32.xlu0 %v22
  %v24 = vpop.xlane.xlu0 %23
  %v25 = vsel %vm18, %v15, 0.0
  %26 = vadd.xlane.f32.xlu0 %v25
  %v27 = vpop.xlane.xlu0 %26
  %v28 = vsel %vm18, %v16, 0.0
  %29 = vadd.xlane.f32.xlu0 %v28
  %v30 = vpop.xlane.xlu0 %29
  %v31 = vsel %vm18, %v17, 0.0
  %32 = vadd.xlane.f32.xlu0 %v31
  %v33 = vpop.xlane.xlu0 %32
  %v34 = vrsqrt.pop %v21
  %v35 = vmul.f32 %v21, %v34
  %vm36 = vcmp.eq.f32.partialorder %v21, inf
  %v37 = vsel %vm36, %v21, %v35
  %vm38 = vcmp.eq.f32.partialorder %v21, 0.0
  %v39 = vand.u32 %v21, 2147483648
  %v40 = vsel %vm38, %v39, %v37
  %v41 = vrsqrt.pop %v24
  %v42 = vmul.f32 %v24, %v41
  %vm43 = vcmp.eq.f32.partialorder %v24, inf
  %v44 = vsel %vm43, %v24, %v42
  %vm45 = vcmp.eq.f32.partialorder %v24, 0.0
  %v46 = vand.u32 %v24, 2147483648
  %v47 = vsel %vm45, %v46, %v44
  %v48 = vrsqrt.pop %v27
  %v49 = vmul.f32 %v27, %v48
  %vm50 = vcmp.eq.f32.partialorder %v27, inf
  %v51 = vsel %vm50, %v27, %v49
  %vm52 = vcmp.eq.f32.partialorder %v27, 0.0
  %v53 = vand.u32 %v27, 2147483648
  %v54 = vsel %vm52, %v53, %v51
  %v55 = vrsqrt.pop %v30
  %v56 = vmul.f32 %v30, %v55
  %vm57 = vcmp.eq.f32.partialorder %v30, inf
  %v58 = vsel %vm57, %v30, %v56
  %vm59 = vcmp.eq.f32.partialorder %v30, 0.0
  %v60 = vand.u32 %v30, 2147483648
  %v61 = vsel %vm59, %v60, %v58
  %v62 = vrsqrt.pop %v33
  %v63 = vmul.f32 %v33, %v62
  %vm64 = vcmp.eq.f32.partialorder %v33, inf
  %v65 = vsel %vm64, %v33, %v63
  %vm66 = vcmp.eq.f32.partialorder %v33, 0.0
  %v67 = vand.u32 %v33, 2147483648
  %v68 = vsel %vm66, %v67, %v65
  %v69 = vmax.f32 %v40, 1e-12
  %v70 = vmax.f32 %v47, 1e-12
  %v71 = vmax.f32 %v54, 1e-12
  %v72 = vmax.f32 %v61, 1e-12
  %v73 = vmax.f32 %v68, 1e-12
  %v74 = vrcp.pop %v69
  %v75 = vmul.f32 %v8, %v74
  %v76 = vrcp.pop %v70
  %v77 = vmul.f32 %v9, %v76
  %v78 = vrcp.pop %v71
  %v79 = vmul.f32 %v10, %v78
  %v80 = vrcp.pop %v72
  %v81 = vmul.f32 %v11, %v80
  %v82 = vrcp.pop %v73
  %v83 = vmul.f32 %v12, %v82
  %84 = vst.msk [vmem:[%s1] sm:$0xff] %vm18, %v75
  %85 = vst.msk [vmem:[%s1 + $0x8] sm:$0xff] %vm18, %v77
  %86 = vst.msk [vmem:[%s1 + $0x10] sm:$0xff] %vm18, %v79
  %87 = vst.msk [vmem:[%s1 + $0x18] sm:$0xff] %vm18, %v81
  %88 = vst.msk [vmem:[%s1 + $0x20] sm:$0xff] %vm18, %v83
  // Predicated region
  $region6: #{tpu_custom_call.1} parent=0 // pred_check
    _
  $region7: #{tpu_custom_call.1} parent=0 // pred_check_branch
    %90 = sbr.rel (0) target = $region9
  $region8: #{tpu_custom_call.1} parent=0 // pred_region
    _
  $region9: #{tpu_custom_call.1} parent=0 // pred_fallthru
    _
  // Predicated region
  $region10: #{tpu_custom_call.1} parent=0 // pred_check
    _
  $region11: #{tpu_custom_call.1} parent=0 // pred_check_branch
    %92 = sbr.rel (0) target = $region13
  $region12: #{tpu_custom_call.1} parent=0 // pred_region
    _
  $region13: #{tpu_custom_call.1} parent=0 // pred_fallthru
    _

</llo_original>
